<compile_context>
chip_gen: v7x
topology: tpu7x:2x2x1
jax: 0.10.0
libtpu: 0.0.40
codegen_flags: <defaults>
</compile_context>

<pallas_src>
import jax
import jax.numpy as jnp
from jax.experimental import pallas as pl
from jax.experimental.pallas import tpu as pltpu


def _stoch_linear_train_kernel(x_ref, w3_ref, b3_ref, o_ref):
    # w3_ref: (3, D, C) stacked [mean_w^T, std_w^T, eps_w^T]
    # b3_ref: (3, C)    stacked [mean_b,   std_b,   eps_b]
    w = w3_ref[0] + w3_ref[1] * w3_ref[2]                       # (D, C) VPU FMA
    b = b3_ref[0:1, :] + b3_ref[1:2, :] * b3_ref[2:3, :]        # (1, C)
    out = jnp.dot(x_ref[...], w, preferred_element_type=jnp.float32) + b
    o_ref[...] = out.astype(o_ref.dtype)


def _stoch_linear_test_kernel(x_ref, w_ref, b_ref, o_ref):
    # w_ref: (D, C) = mean_w^T, b_ref: (1, C) = mean_b
    out = jnp.dot(x_ref[...], w_ref[...],
                  preferred_element_type=jnp.float32) + b_ref[...]
    o_ref[...] = out.astype(o_ref.dtype)


def stochastic_classifier_forward(x, mean_w, mean_b, std_w, std_b,
                                  eps_w=None, eps_b=None, mode="train"):
    """x: (B, D) f32; mean_w/std_w: (C, D) (PyTorch layout); mean_b/std_b: (C,)."""
    B, D = x.shape
    C = mean_w.shape[0]

    # Batch tile: whole batch for small B; 128-row tiles (parallel grid) at scale.
    if B > 128 and B % 128 == 0:
        block_b = 128
    else:
        block_b = B
    grid = (B // block_b,)

    cparams = pltpu.CompilerParams(dimension_semantics=("parallel",))

    x_spec = pl.BlockSpec((block_b, D), lambda i: (i, 0))
    out_spec = pl.BlockSpec((block_b, C), lambda i: (i, 0))
    out_shape = jax.ShapeDtypeStruct((B, C), jnp.float32)

    if mode == "test":
        w_t = mean_w.T                      # (D, C): class axis lane-dense
        b2 = mean_b.reshape(1, C)
        return pl.pallas_call(
            _stoch_linear_test_kernel,
            out_shape=out_shape,
            grid=grid,
            in_specs=[
                x_spec,
                pl.BlockSpec((D, C), lambda i: (0, 0)),
                pl.BlockSpec((1, C), lambda i: (0, 0)),
            ],
            out_specs=out_spec,
            compiler_params=cparams,
        )(x, w_t, b2)

    assert eps_w is not None and eps_b is not None

    # Pre-transpose once in the wrapper and stack -> one weight DMA, one bias DMA.
    w3 = jnp.stack([mean_w.T, std_w.T, eps_w.T], axis=0)   # (3, D, C)
    b3 = jnp.stack([mean_b, std_b, eps_b], axis=0)         # (3, C)

    return pl.pallas_call(
        _stoch_linear_train_kernel,
        out_shape=out_shape,
        grid=grid,
        in_specs=[
            x_spec,
            pl.BlockSpec((3, D, C), lambda i: (0, 0, 0)),
            pl.BlockSpec((3, C), lambda i: (0, 0)),
        ],
        out_specs=out_spec,
        compiler_params=cparams,
    )(x, w3, b3)


def _ref_forward(x, mean_w, mean_b, std_w, std_b, eps_w, eps_b):
    w = mean_w + std_w * eps_w
    b = mean_b + std_b * eps_b
    return x @ w.T + b


if __name__ == "__main__":
    # Small shapes consistent with the module:
    #   feature_dim * block_expansion = 32, num_classes = 8, batch = 8
    B, D, C = 8, 32, 8

    key = jax.random.PRNGKey(0)
    k_x, k_mw, k_sw, k_ew, k_eb = jax.random.split(key, 5)

    x = jax.random.normal(k_x, (B, D), jnp.float32)

    # Deterministic parameter init. nn.Linear default weight init approximated
    # with uniform(-1/sqrt(D), 1/sqrt(D)); initialize_weights() zeroes biases.
    bound = 1.0 / jnp.sqrt(jnp.float32(D))
    mean_w = jax.random.uniform(k_mw, (C, D), jnp.float32, -bound, bound)
    std_w = jax.random.uniform(k_sw, (C, D), jnp.float32, -bound, bound)
    mean_b = jnp.zeros((C,), jnp.float32)
    std_b = jnp.zeros((C,), jnp.float32)

    # torch.randn(...) equivalents for train mode.
    eps_w = jax.random.normal(k_ew, (C, D), jnp.float32)
    eps_b = jax.random.normal(k_eb, (C,), jnp.float32)

    # Train mode
    out_train = stochastic_classifier_forward(
        x, mean_w, mean_b, std_w, std_b, eps_w, eps_b, mode="train")
    out_train = jax.block_until_ready(out_train)
    ref_train = _ref_forward(x, mean_w, mean_b, std_w, std_b, eps_w, eps_b)
    assert out_train.shape == (B, C)
    assert jnp.allclose(out_train, ref_train, atol=1e-5, rtol=1e-5)

    # Test mode (deterministic weights, no eps inputs at all)
    out_test = stochastic_classifier_forward(
        x, mean_w, mean_b, std_w, std_b, mode="test")
    out_test = jax.block_until_ready(out_test)
    ref_test = x @ mean_w.T + mean_b
    assert out_test.shape == (B, C)
    assert jnp.allclose(out_test, ref_test, atol=1e-5, rtol=1e-5)

    print("KERNEL_OK")
</pallas_src>

<mosaic_0001>
module attributes {stable_mosaic.version = 11 : i64} {
  func.func @_stoch_linear_train_kernel(%arg0: i32, %arg1: memref<8x32xf32, #tpu.memory_space<vmem>>, %arg2: memref<3x32x8xf32, #tpu.memory_space<vmem>>, %arg3: memref<3x8xf32, #tpu.memory_space<vmem>>, %arg4: memref<8x8xf32, #tpu.memory_space<vmem>>) attributes {dimension_semantics = [#tpu.dimension_semantics<parallel>], iteration_bounds = array<i64: 1>, scalar_prefetch = 0 : i64, scratch_operands = 0 : i64, tpu.core_type = #tpu.core_type<tc>, window_params = [{transform_indices = @transform_0, window_bounds = array<i64: 8, 32>}, {pipeline_mode = #tpu.pipeline_mode<synchronous>, transform_indices = @transform_1, window_bounds = array<i64: 3, 32, 8>}, {pipeline_mode = #tpu.pipeline_mode<synchronous>, transform_indices = @transform_2, window_bounds = array<i64: 3, 8>}, {transform_indices = @transform_3, window_bounds = array<i64: 8, 8>}]} {
    %c0 = arith.constant 0 : index
    %c0_0 = arith.constant 0 : index
    %c0_1 = arith.constant 0 : index
    %0 = vector.load %arg2[%c0, %c0_0, %c0_1] : memref<3x32x8xf32, #tpu.memory_space<vmem>>, vector<1x32x8xf32>
    %1 = vector.shape_cast %0 : vector<1x32x8xf32> to vector<32x8xf32>
    %c1 = arith.constant 1 : index
    %c0_2 = arith.constant 0 : index
    %c0_3 = arith.constant 0 : index
    %2 = vector.load %arg2[%c1, %c0_2, %c0_3] : memref<3x32x8xf32, #tpu.memory_space<vmem>>, vector<1x32x8xf32>
    %3 = vector.shape_cast %2 : vector<1x32x8xf32> to vector<32x8xf32>
    %c2 = arith.constant 2 : index
    %c0_4 = arith.constant 0 : index
    %c0_5 = arith.constant 0 : index
    %4 = vector.load %arg2[%c2, %c0_4, %c0_5] : memref<3x32x8xf32, #tpu.memory_space<vmem>>, vector<1x32x8xf32>
    %5 = vector.shape_cast %4 : vector<1x32x8xf32> to vector<32x8xf32>
    %6 = arith.mulf %3, %5 : vector<32x8xf32>
    %7 = arith.addf %1, %6 : vector<32x8xf32>
    %c0_6 = arith.constant 0 : index
    %c0_7 = arith.constant 0 : index
    %8 = vector.load %arg3[%c0_6, %c0_7] : memref<3x8xf32, #tpu.memory_space<vmem>>, vector<1x8xf32>
    %c1_8 = arith.constant 1 : index
    %c0_9 = arith.constant 0 : index
    %9 = vector.load %arg3[%c1_8, %c0_9] : memref<3x8xf32, #tpu.memory_space<vmem>>, vector<1x8xf32>
    %c2_10 = arith.constant 2 : index
    %c0_11 = arith.constant 0 : index
    %10 = vector.load %arg3[%c2_10, %c0_11] : memref<3x8xf32, #tpu.memory_space<vmem>>, vector<1x8xf32>
    %11 = arith.mulf %9, %10 : vector<1x8xf32>
    %12 = arith.addf %8, %11 : vector<1x8xf32>
    %c0_12 = arith.constant 0 : index
    %c0_13 = arith.constant 0 : index
    %13 = vector.load %arg1[%c0_12, %c0_13] : memref<8x32xf32, #tpu.memory_space<vmem>>, vector<8x32xf32>
    %cst = arith.constant dense<0.000000e+00> : vector<8x8xf32>
    %14 = tpu.matmul %13, %7, %cst {dimension_numbers = #tpu.dot_dimension_numbers<[1], [0], [0], [1], [0, 0, 1, 1], [], []>} : vector<8x32xf32>, vector<32x8xf32>, vector<8x8xf32> -> vector<8x8xf32>
    %15 = vector.broadcast %12 : vector<1x8xf32> to vector<8x8xf32>
    %16 = arith.addf %14, %15 : vector<8x8xf32>
    %c0_14 = arith.constant 0 : index
    %c0_15 = arith.constant 0 : index
    %17 = vector.load %arg4[%c0_14, %c0_15] : memref<8x8xf32, #tpu.memory_space<vmem>>, vector<8x8xf32>
    tpu.vector_store %arg4[%c0_14, %c0_15], %16 {strides = array<i32>} : memref<8x8xf32, #tpu.memory_space<vmem>>, vector<8x8xf32>,
    return
  }
  func.func @transform_0(%arg0: i32) -> (i32, i32) {
    %c0_i32 = arith.constant 0 : i32
    %c0_i32_0 = arith.constant 0 : i32
    return %arg0, %c0_i32 : i32, i32
  }
  func.func @transform_1(%arg0: i32) -> (i32, i32, i32) {
    %c0_i32 = arith.constant 0 : i32
    %c0_i32_0 = arith.constant 0 : i32
    %c0_i32_1 = arith.constant 0 : i32
    %c0_i32_2 = arith.constant 0 : i32
    return %c0_i32, %c0_i32_0, %c0_i32_1 : i32, i32, i32
  }
  func.func @transform_2(%arg0: i32) -> (i32, i32) {
    %c0_i32 = arith.constant 0 : i32
    %c0_i32_0 = arith.constant 0 : i32
    %c0_i32_1 = arith.constant 0 : i32
    return %c0_i32, %c0_i32_0 : i32, i32
  }
  func.func @transform_3(%arg0: i32) -> (i32, i32) {
    %c0_i32 = arith.constant 0 : i32
    %c0_i32_0 = arith.constant 0 : i32
    return %arg0, %c0_i32 : i32, i32
  }
}

</mosaic_0001>

<llo_original>
// kernel: tpu_custom_call.1
$region0: #{tpu_custom_call.1}
  #allocation0 [shape = 'u32[]', space=smem, size = 0x4, offset = 0x4, fixed_abs, tag = 'smem constant byte address 0x4 - core index']
  #allocation1 [shape = 'u32[144,128]{1,0:T(1,128)}', space=vmem, size = 0x12000, scoped, tag = 'internal scratch']
  %s0 = inlined_call_operand.vmem [shape: f32[8,32], index: 0, kind: input, shape index: {}]
  %s1 = inlined_call_operand.vmem [shape: f32[3,32,8], index: 1, kind: input, shape index: {}]
  %s2 = inlined_call_operand.vmem [shape: f32[3,8], index: 2, kind: input, shape index: {}]
  %s3 = inlined_call_operand.hbm [shape: f32[8,8], index: 3, kind: output, shape index: {}]
  %s4 = sld [smem:[#allocation0]]
  $region22: #{tpu_custom_call.1} parent=0
    _
  %s6 = ssub.s32 1, %s4
  %s7 = scalar_select 0, %s6, %s4
  $region1: #{tpu_custom_call.1} parent=0
    #allocation2 [shape = 'u8[4096]{0}', space=vmem, size = 0x1000, scoped, tag = 'output window, operand 0, single buffered']
    #allocation3 [shape = 's32[1]{0}', space=sflag, size = 0x4, scoped, tag = 'scoped memory for tpu_custom_call.1']
    %8 = vsyncpa [#allocation3], 0
    // Predicated region
    $region2: #{tpu_custom_call.1} parent=1 // pred_check
      _
    $region3: #{tpu_custom_call.1} parent=1 // pred_check_branch
      %10 = sbr.rel (0) target = $region5
    $region4: #{tpu_custom_call.1} parent=1 // pred_region
      _
    $region5: #{tpu_custom_call.1} parent=1 // pred_fallthru
      _
    // Predicated region
    $region6: #{tpu_custom_call.1} parent=1 // pred_check
      _
    $region7: #{tpu_custom_call.1} parent=1 // pred_check_branch
      %12 = sbr.rel (0) target = $region9
    $region8: #{tpu_custom_call.1} parent=1 // pred_region
      _
    $region9: #{tpu_custom_call.1} parent=1 // pred_fallthru
      _
    // Predicated region
    $region10: #{tpu_custom_call.1} parent=1 // pred_check
      _
    $region11: #{tpu_custom_call.1} parent=1 // pred_check_branch
      %14 = sbr.rel (0) target = $region13
    $region12: #{tpu_custom_call.1} parent=1 // pred_region
      _
    $region13: #{tpu_custom_call.1} parent=1 // pred_fallthru
      _
    %v15 = vld [vmem:[%s1] sm:$0xff]
    %v16 = vld [vmem:[%s1 + $0x8] sm:$0xff]
    %v17 = vld [vmem:[%s1 + $0x10] sm:$0xff]
    %v18 = vld [vmem:[%s1 + $0x18] sm:$0xff]
    %s19 = scalar_lea.vmem %s1, 32
    %v20 = vld [vmem:[%s19] sm:$0xff]
    %v21 = vld [vmem:[%s19 + $0x8] sm:$0xff]
    %v22 = vld [vmem:[%s19 + $0x10] sm:$0xff]
    %v23 = vld [vmem:[%s19 + $0x18] sm:$0xff]
    %s24 = scalar_lea.vmem %s1, 64
    %v25 = vld [vmem:[%s24] sm:$0xff]
    %v26 = vld [vmem:[%s24 + $0x8] sm:$0xff]
    %v27 = vld [vmem:[%s24 + $0x10] sm:$0xff]
    %v28 = vld [vmem:[%s24 + $0x18] sm:$0xff]
    %v29 = vmul.f32 %v20, %v25
    %v30 = vmul.f32 %v21, %v26
    %v31 = vmul.f32 %v22, %v27
    %v32 = vmul.f32 %v23, %v28
    %v33 = vadd.f32 %v15, %v29
    %v34 = vadd.f32 %v16, %v30
    %v35 = vadd.f32 %v17, %v31
    %v36 = vadd.f32 %v18, %v32
    %v37 = vld [vmem:[%s2] sm:$0x1]
    %v38 = vld [vmem:[%s2 + $0x1] sm:$0x1]
    %v39 = vld [vmem:[%s2 + $0x2] sm:$0x1]
    %v40 = vmul.f32 %v38, %v39
    %v41 = vadd.f32 %v37, %v40
    %v42 = vld [vmem:[%s0] sm:$0xff]
    %v43 = vlaneseq
    %v44 = vshrl.u32 %v43, 7
    %v45 = vsub.s32 0, %v44
    %v46 = vrot.slane %v41, %v45
    %vm47 = vcmask 261120
    %v49 = vsel %vm47, %v42, 0
    %51 = vmatprep.subr.mxu0 0.0
    %52 = vmatpush1.msra.mxu0 %v33
    %53 = vmatprep.subr.mxu0 0.0
    %54 = vmatpush1.msra.mxu0 %v34
    %55 = vmatprep.subr.mxu0 0.0
    %56 = vmatpush1.msra.mxu0 %v35
    %57 = vmatprep.subr.mxu0 0.0
    %58 = vmatpush1.msra.mxu0 %v36
    %59 = vmatprep.subr.mxu0 0.0
    %60 = vmatpush1.msra.mxu0 0.0
    %61 = vmatprep.subr.mxu0 0.0
    %62 = vmatpush1.msra.mxu0 0.0
    %63 = vmatprep.subr.mxu0 0.0
    %64 = vmatpush1.msra.mxu0 0.0
    %65 = vmatprep.subr.mxu0 0.0
    %66 = vmatpush1.msra.mxu0 0.0
    %67 = vmatprep.subr.mxu0 0.0
    %68 = vmatpush1.msra.mxu0 0.0
    %69 = vmatprep.subr.mxu0 0.0
    %70 = vmatpush1.msra.mxu0 0.0
    %71 = vmatprep.subr.mxu0 0.0
    %72 = vmatpush1.msra.mxu0 0.0
    %73 = vmatprep.subr.mxu0 0.0
    %74 = vmatpush1.msra.mxu0 0.0
    %75 = vmatprep.subr.mxu0 0.0
    %76 = vmatpush1.msra.mxu0 0.0
    %77 = vmatprep.subr.mxu0 0.0
    %78 = vmatpush1.msra.mxu0 0.0
    %79 = vmatprep.subr.mxu0 0.0
    %80 = vmatpush1.msra.mxu0 0.0
    %81 = vmatprep.subr.mxu0 0.0
    %82 = vmatpush1.msra.mxu0 0.0
    %83 = vmatprep.subr.mxu0 0.0
    %84 = vmatpush1.msra.mxu0 0.0
    %85 = vmatprep.subr.mxu0 0.0
    %86 = vmatpush1.msra.mxu0 0.0
    %87 = vmatprep.subr.mxu0 0.0
    %88 = vmatpush1.msra.mxu0 0.0
    %89 = vmatprep.subr.mxu0 0.0
    %90 = vmatpush1.msra.mxu0 0.0
    %91 = vmatprep.subr.mxu0 0.0
    %92 = vmatpush1.msra.mxu0 0.0
    %93 = vmatprep.subr.mxu0 0.0
    %94 = vmatpush1.msra.mxu0 0.0
    %95 = vmatprep.subr.mxu0 0.0
    %96 = vmatpush1.msra.mxu0 0.0
    %97 = vmatprep.subr.mxu0 0.0
    %98 = vmatpush1.msra.mxu0 0.0
    %99 = vmatprep.subr.mxu0 0.0
    %100 = vmatpush1.msra.mxu0 0.0
    %101 = vmatprep.subr.mxu0 0.0
    %102 = vmatpush1.msra.mxu0 0.0
    %103 = vmatprep.subr.mxu0 0.0
    %104 = vmatpush1.msra.mxu0 0.0
    %105 = vmatprep.subr.mxu0 0.0
    %106 = vmatpush1.msra.mxu0 0.0
    %107 = vmatprep.subr.mxu0 0.0
    %108 = vmatpush1.msra.mxu0 0.0
    %109 = vmatprep.subr.mxu0 0.0
    %110 = vmatpush1.msra.mxu0 0.0
    %111 = vmatprep.subr.mxu0 0.0
    %112 = vmatpush1.msra.mxu0 0.0
    %113 = vmatprep.subr.mxu0 0.0
    %114 = vmatpush1.msra.mxu0 0.0
    %115 = vmatprep.mubr.f32.mxu0 0.0
    %116 = vmatmul.mubr.f32.gmra.mrb[0].mxu0 %v49
    %v117 = vpop.f32.mrb[0].mxu0
    %v118 = vadd.f32 %v46, %v117
    %v119 = vpop.f32.mrb[0].mxu0
    %120 = vdwg.mxu0
    %vm121 = vcmask 64512
    %122 = vst.msk [vmem:[#allocation2] sm:$0xff] %vm121, %v118
    // Predicated region
    $region14: #{tpu_custom_call.1} parent=1 // pred_check
      _
    $region15: #{tpu_custom_call.1} parent=1 // pred_check_branch
      %124 = sbr.rel (0) target = $region17
    $region16: #{tpu_custom_call.1} parent=1 // pred_region
      %s126 = ssub.s32 128, 128
      %127 = vsyncadd [#allocation3], %s126
      %s129 = sshll.u32 [#allocation2], 4
      %s130 = int_to_ptr.vmem [resolvable:$true] %s129
      %132 = dma.vmem_to_hbm [thread:$0]  %s130, 128, %s3, [#allocation3]
    $region17: #{tpu_custom_call.1} parent=1 // pred_fallthru
      _
    // Predicated region
    $region18: #{tpu_custom_call.1} parent=1 // pred_check
      _
    $region19: #{tpu_custom_call.1} parent=1 // pred_check_branch
      %134 = sbr.rel (0) target = $region21
    $region20: #{tpu_custom_call.1} parent=1 // pred_region
      %135 = dma.done [#allocation3], 128
    $region21: #{tpu_custom_call.1} parent=1 // pred_fallthru
      _
    %136 = vsyncpa [#allocation3], 1

</llo_original>
